<compile_context>
chip_gen: v5e
topology: v5e:2x2
jax: 0.10.0
libtpu: 0.0.40
codegen_flags: <defaults>
</compile_context>

<pallas_src>
import jax
import jax.numpy as jnp
from jax.experimental import pallas as pl
from jax.experimental.pallas import tpu as pltpu

LANE = 128                  # vreg lane width (fast axis); 128 samples per row-block
MAX_ROWS_PER_BLOCK = 4096   # per-step slabs: x 4 MiB + out 2 MiB (f32), double-buffered


def _round_up(a, m):
    return ((a + m - 1) // m) * m


def _logistic_kernel(b_ref, w_ref, x_ref, o_ref):
    # b_ref: SMEM f32[1]            bias (scalar path, no vector load)
    # w_ref: VMEM f32[256, 128]     folded de-interleave + weights, resident across steps
    # x_ref: VMEM [TR, 256]         interleaved (f0, f1, f0, f1, ...) lane-dense block
    # o_ref: VMEM f32[TR, 128]      lane-dense -> unmasked stores
    xv = x_ref[...].astype(jnp.float32)
    z = jnp.dot(
        xv,
        w_ref[...],
        preferred_element_type=jnp.float32,
        precision=jax.lax.Precision.HIGHEST,
    )
    o_ref[...] = jax.nn.sigmoid(z + b_ref[0]).astype(o_ref.dtype)


def binary_classifier_forward(x, weight, bias, *, min_pallas_batch=131072):
    """x: [N, 2], weight: [1, 2] (PyTorch nn.Linear layout), bias: [1] -> [N, 1] f32."""
    n, f = x.shape
    assert f == 2, "BinaryClassifier expects 2 input features"

    w = weight.reshape(-1).astype(jnp.float32)   # [w0, w1]
    b = bias.reshape(-1).astype(jnp.float32)     # [b]

    # ---- Small-N fast path: one fused XLA op beats kernel launch + padding. ----
    if n < min_pallas_batch:
        return jax.nn.sigmoid(x.astype(jnp.float32) @ w.reshape(2, 1) + b)

    # ---- Tiling: bound zero-padding to <8 rows per block, keep >=2 blocks. ----
    rows = pl.cdiv(n, LANE)
    grid = pl.cdiv(rows, MAX_ROWS_PER_BLOCK)
    if rows >= 16 and grid < 2:
        grid = 2                       # keep both v7x TensorCores busy
    if grid == 1:
        tr = rows                      # block == full dim (no 8-row constraint)
    else:
        tr = _round_up(pl.cdiv(rows, grid), 8)
        grid = pl.cdiv(rows, tr)
    rows_pad = grid * tr
    n_pad = rows_pad * LANE

    # ---- Input: no transpose.  Pad only when needed, then a FREE reshape. ----
    if n_pad != n:
        x = jnp.pad(x, ((0, n_pad - n), (0, 0)))
    x_blk = x.reshape(rows_pad, 2 * LANE)          # row r, lane 2j+c = x[r*128+j, c]

    # Folded de-interleave + weights: W[2j, j] = w0, W[2j+1, j] = w1 (128 KiB).
    eye = jnp.eye(LANE, dtype=jnp.float32)
    w_mat = jnp.stack([w[0] * eye, w[1] * eye], axis=1).reshape(2 * LANE, LANE)

    out = pl.pallas_call(
        _logistic_kernel,
        out_shape=jax.ShapeDtypeStruct((rows_pad, LANE), jnp.float32),
        grid_spec=pl.GridSpec(
            grid=(grid,),
            in_specs=[
                # Bias scalar lives in SMEM (4 bytes).
                pl.BlockSpec(memory_space=pltpu.MemorySpace.SMEM),
                # Weight matrix: constant block index -> DMA'd once, stays resident.
                pl.BlockSpec((2 * LANE, LANE), lambda i: (0, 0)),
                # One interleaved row-block of samples per step.
                pl.BlockSpec((tr, 2 * LANE), lambda i: (i, 0)),
            ],
            out_specs=pl.BlockSpec((tr, LANE), lambda i: (i, 0)),
        ),
        compiler_params=pltpu.CompilerParams(
            dimension_semantics=("parallel",),
            vmem_limit_bytes=32 << 20,
        ),
    )(b, w_mat, x_blk)

    # ---- Output: free reshape; slice only when N is not a multiple of 128. ----
    y = out.reshape(n_pad, 1)
    return y if n_pad == n else y[:n]


if __name__ == "__main__":
    key = jax.random.PRNGKey(0)
    kx, kw, kb, kx2, kx3 = jax.random.split(key, 5)

    # nn.Linear(2, 1) parameters: weight [1, 2], bias [1].
    weight = jax.random.normal(kw, (1, 2), dtype=jnp.float32) * 0.5
    bias = jax.random.normal(kb, (1,), dtype=jnp.float32) * 0.1

    def ref(xv):
        return jax.nn.sigmoid(xv @ weight.T + bias)

    # Pallas path, N a multiple of 128 -> zero wrapper-side pad/strip copies.
    x1 = jax.random.normal(kx, (256, 2), dtype=jnp.float32)
    y1 = jax.block_until_ready(
        binary_classifier_forward(x1, weight, bias, min_pallas_batch=0))
    assert y1.shape == (256, 1)
    assert jnp.allclose(y1, ref(x1), atol=1e-5), "mismatch on aligned batch"

    # Pallas path, ragged N -> exercises the single pad + output slice.
    x2 = jax.random.normal(kx2, (300, 2), dtype=jnp.float32)
    y2 = jax.block_until_ready(
        binary_classifier_forward(x2, weight, bias, min_pallas_batch=0))
    assert y2.shape == (300, 1)
    assert jnp.allclose(y2, ref(x2), atol=1e-5), "mismatch on ragged batch"

    # Default small-N fast path (no Pallas launch at tiny batch sizes).
    x3 = jax.random.normal(kx3, (8, 2), dtype=jnp.float32)
    y3 = jax.block_until_ready(binary_classifier_forward(x3, weight, bias))
    assert y3.shape == (8, 1)
    assert jnp.allclose(y3, ref(x3), atol=1e-6), "mismatch on fast path"

    print("KERNEL_OK")
</pallas_src>

<mosaic_0001>
module attributes {stable_mosaic.version = 11 : i64} {
  func.func @_logistic_kernel(%arg0: i32, %arg1: memref<1xf32, #tpu.memory_space<smem>>, %arg2: memref<256x128xf32, #tpu.memory_space<vmem>>, %arg3: memref<2x256xf32, #tpu.memory_space<vmem>>, %arg4: memref<2x128xf32, #tpu.memory_space<vmem>>) attributes {dimension_semantics = [#tpu.dimension_semantics<parallel>], iteration_bounds = array<i64: 1>, scalar_prefetch = 0 : i64, scratch_operands = 0 : i64, tpu.core_type = #tpu.core_type<tc>, window_params = [{transform_indices = @transform_0, window_bounds = array<i64: 1>}, {pipeline_mode = #tpu.pipeline_mode<synchronous>, transform_indices = @transform_1, window_bounds = array<i64: 256, 128>}, {transform_indices = @transform_2, window_bounds = array<i64: 2, 256>}, {transform_indices = @transform_3, window_bounds = array<i64: 2, 128>}]} {
    %c0 = arith.constant 0 : index
    %c0_0 = arith.constant 0 : index
    %0 = vector.load %arg3[%c0, %c0_0] : memref<2x256xf32, #tpu.memory_space<vmem>>, vector<2x256xf32>
    %c0_1 = arith.constant 0 : index
    %c0_2 = arith.constant 0 : index
    %1 = vector.load %arg2[%c0_1, %c0_2] : memref<256x128xf32, #tpu.memory_space<vmem>>, vector<256x128xf32>
    %cst = arith.constant dense<0.000000e+00> : vector<2x128xf32>
    %2 = tpu.matmul %0, %1, %cst {dimension_numbers = #tpu.dot_dimension_numbers<[1], [0], [0], [1], [0, 0, 1, 1], [], []>, precision = #tpu.contract_precision<fp32>} : vector<2x256xf32>, vector<256x128xf32>, vector<2x128xf32> -> vector<2x128xf32>
    %c0_3 = arith.constant 0 : index
    %3 = memref.load %arg1[%c0_3] : memref<1xf32, #tpu.memory_space<smem>>
    %4 = vector.broadcast %3 : f32 to vector<2x128xf32>
    %5 = arith.addf %2, %4 : vector<2x128xf32>
    %6 = arith.negf %5 : vector<2x128xf32>
    %7 = math.exp %6 : vector<2x128xf32>
    %cst_4 = arith.constant 1.000000e+00 : f32
    %8 = vector.broadcast %cst_4 : f32 to vector<2x128xf32>
    %9 = arith.addf %8, %7 : vector<2x128xf32>
    %10 = arith.divf %8, %9 : vector<2x128xf32>
    %c0_5 = arith.constant 0 : index
    %c0_6 = arith.constant 0 : index
    %11 = vector.load %arg4[%c0_5, %c0_6] : memref<2x128xf32, #tpu.memory_space<vmem>>, vector<2x128xf32>
    tpu.vector_store %arg4[%c0_5, %c0_6], %10 {strides = array<i32>} : memref<2x128xf32, #tpu.memory_space<vmem>>, vector<2x128xf32>,
    return
  }
  func.func @transform_0(%arg0: i32) -> i32 {
    %c0_i32 = arith.constant 0 : i32
    %c0_i32_0 = arith.constant 0 : i32
    return %c0_i32 : i32
  }
  func.func @transform_1(%arg0: i32) -> (i32, i32) {
    %c0_i32 = arith.constant 0 : i32
    %c0_i32_0 = arith.constant 0 : i32
    %c0_i32_1 = arith.constant 0 : i32
    return %c0_i32, %c0_i32_0 : i32, i32
  }
  func.func @transform_2(%arg0: i32) -> (i32, i32) {
    %c0_i32 = arith.constant 0 : i32
    %c0_i32_0 = arith.constant 0 : i32
    return %arg0, %c0_i32 : i32, i32
  }
  func.func @transform_3(%arg0: i32) -> (i32, i32) {
    %c0_i32 = arith.constant 0 : i32
    %c0_i32_0 = arith.constant 0 : i32
    return %arg0, %c0_i32 : i32, i32
  }
}

</mosaic_0001>

<llo_original>
// kernel: tpu_custom_call.1
$region0: #{tpu_custom_call.1}
  #allocation0 [shape = 'u32[]', space=smem, size = 0x4, offset = 0x4, fixed_abs, tag = 'smem constant byte address 0x4 - core index']
  #allocation1 [shape = 'u32[72,128]{1,0:T(1,128)}', space=vmem, size = 0x9000, scoped, tag = 'internal scratch']
  #allocation2 [shape = 'f32[1]{0:T(128)S(6)}', space=smem, size = 0x200, scoped, tag = 'scoped memory for tpu_custom_call.1']
  %s0 = inlined_call_operand.<no memory space> [shape: f32[1], index: 0, kind: input, shape index: {}]
  %s1 = inlined_call_operand.hbm [shape: f32[256,128], index: 1, kind: input, shape index: {}]
  %s2 = inlined_call_operand.hbm [shape: f32[2,256], index: 2, kind: input, shape index: {}]
  %s3 = inlined_call_operand.hbm [shape: f32[2,128], index: 3, kind: output, shape index: {}]
  %s4 = sld [smem:[#allocation0]]
  $region30: #{tpu_custom_call.1} parent=0
    _
  %s6 = ssub.s32 1, %s4
  %s7 = scalar_select 0, %s6, %s4
  %8 = sst [smem:[#allocation2]] %s0
  $region1: #{tpu_custom_call.1} parent=0
    #allocation3 [shape = 'u8[131072]{0}', space=vmem, size = 0x20000, scoped, tag = 'input window, operand 1, single buffered']
    #allocation4 [shape = 's32[1]{0}', space=sflag, size = 0x4, scoped, tag = 'scoped memory for tpu_custom_call.1']
    #allocation5 [shape = 's32[1]{0}', space=sflag, size = 0x4, scoped, tag = 'scoped memory for tpu_custom_call.1']
    #allocation6 [shape = 'u8[2048]{0}', space=vmem, size = 0x800, scoped, tag = 'input window, operand 2, single buffered']
    #allocation7 [shape = 's32[1]{0}', space=sflag, size = 0x4, scoped, tag = 'scoped memory for tpu_custom_call.1']
    #allocation8 [shape = 'u8[1024]{0}', space=vmem, size = 0x400, scoped, tag = 'output window, operand 0, single buffered']
    %9 = vsyncpa [#allocation4], 0
    %10 = vsyncpa [#allocation7], 0
    %11 = vsyncpa [#allocation5], 0
    // Predicated region
    $region2: #{tpu_custom_call.1} parent=1 // pred_check
      _
    $region3: #{tpu_custom_call.1} parent=1 // pred_check_branch
      %13 = sbr.rel (0) target = $region5
    $region4: #{tpu_custom_call.1} parent=1 // pred_region
      _
    $region5: #{tpu_custom_call.1} parent=1 // pred_fallthru
      _
    // Predicated region
    $region6: #{tpu_custom_call.1} parent=1 // pred_check
      _
    $region7: #{tpu_custom_call.1} parent=1 // pred_check_branch
      %15 = sbr.rel (0) target = $region9
    $region8: #{tpu_custom_call.1} parent=1 // pred_region
      %17 = vsyncadd [#allocation4], 0
      %s18 = sshll.u32 %s1, 4
      %s19 = int_to_ptr.hbm [resolvable:$true] %s18
      %s20 = sshll.u32 [#allocation3], 4
      %s21 = int_to_ptr.vmem [resolvable:$true] %s20
      %26 = dma.hbm_to_vmem [thread:$0]  %s19, 4096, %s21, [#allocation4], 128, 128, 8
    $region9: #{tpu_custom_call.1} parent=1 // pred_fallthru
      _
    // Predicated region
    $region10: #{tpu_custom_call.1} parent=1 // pred_check
      _
    $region11: #{tpu_custom_call.1} parent=1 // pred_check_branch
      %28 = sbr.rel (0) target = $region13
    $region12: #{tpu_custom_call.1} parent=1 // pred_region
      %30 = vsyncadd [#allocation7], 0
      %s32 = sshll.u32 %s2, 4
      %s33 = int_to_ptr.hbm [resolvable:$true] %s32
      %s34 = sshll.u32 [#allocation6], 4
      %s35 = int_to_ptr.vmem [resolvable:$true] %s34
      %37 = dma.hbm_to_vmem [thread:$0]  %s33, 64, %s35, [#allocation7]
    $region13: #{tpu_custom_call.1} parent=1 // pred_fallthru
      _
    // Predicated region
    $region14: #{tpu_custom_call.1} parent=1 // pred_check
      _
    $region15: #{tpu_custom_call.1} parent=1 // pred_check_branch
      %39 = sbr.rel (0) target = $region17
    $region16: #{tpu_custom_call.1} parent=1 // pred_region
      %41 = dma.done [#allocation4], 4096
    $region17: #{tpu_custom_call.1} parent=1 // pred_fallthru
      _
    // Predicated region
    $region18: #{tpu_custom_call.1} parent=1 // pred_check
      _
    $region19: #{tpu_custom_call.1} parent=1 // pred_check_branch
      %43 = sbr.rel (0) target = $region21
    $region20: #{tpu_custom_call.1} parent=1 // pred_region
      %45 = dma.done [#allocation7], 64
    $region21: #{tpu_custom_call.1} parent=1 // pred_fallthru
      _
    %v46 = vld [vmem:[#allocation6] sm:$0xf]
    %v47 = vld [vmem:[#allocation3] sm:$0xff]
    %v48 = vld [vmem:[#allocation3 + $0x8] sm:$0xff]
    %v49 = vld [vmem:[#allocation3 + $0x10] sm:$0xff]
    %v50 = vld [vmem:[#allocation3 + $0x18] sm:$0xff]
    %v51 = vld [vmem:[#allocation3 + $0x20] sm:$0xff]
    %v52 = vld [vmem:[#allocation3 + $0x28] sm:$0xff]
    %v53 = vld [vmem:[#allocation3 + $0x30] sm:$0xff]
    %v54 = vld [vmem:[#allocation3 + $0x38] sm:$0xff]
    %v55 = vld [vmem:[#allocation3 + $0x40] sm:$0xff]
    %v56 = vld [vmem:[#allocation3 + $0x48] sm:$0xff]
    %v57 = vld [vmem:[#allocation3 + $0x50] sm:$0xff]
    %v58 = vld [vmem:[#allocation3 + $0x58] sm:$0xff]
    %v59 = vld [vmem:[#allocation3 + $0x60] sm:$0xff]
    %v60 = vld [vmem:[#allocation3 + $0x68] sm:$0xff]
    %v61 = vld [vmem:[#allocation3 + $0x70] sm:$0xff]
    %v62 = vld [vmem:[#allocation3 + $0x78] sm:$0xff]
    %v63 = vld [vmem:[#allocation3 + $0x80] sm:$0xff]
    %v64 = vld [vmem:[#allocation3 + $0x88] sm:$0xff]
    %v65 = vld [vmem:[#allocation3 + $0x90] sm:$0xff]
    %v66 = vld [vmem:[#allocation3 + $0x98] sm:$0xff]
    %v67 = vld [vmem:[#allocation3 + $0xa0] sm:$0xff]
    %v68 = vld [vmem:[#allocation3 + $0xa8] sm:$0xff]
    %v69 = vld [vmem:[#allocation3 + $0xb0] sm:$0xff]
    %v70 = vld [vmem:[#allocation3 + $0xb8] sm:$0xff]
    %v71 = vld [vmem:[#allocation3 + $0xc0] sm:$0xff]
    %v72 = vld [vmem:[#allocation3 + $0xc8] sm:$0xff]
    %v73 = vld [vmem:[#allocation3 + $0xd0] sm:$0xff]
    %v74 = vld [vmem:[#allocation3 + $0xd8] sm:$0xff]
    %v75 = vld [vmem:[#allocation3 + $0xe0] sm:$0xff]
    %v76 = vld [vmem:[#allocation3 + $0xe8] sm:$0xff]
    %v77 = vld [vmem:[#allocation3 + $0xf0] sm:$0xff]
    %v78 = vld [vmem:[#allocation3 + $0xf8] sm:$0xff]
    %s79 = sld [smem:[#allocation2]]
    %v80 = vstv %s79
    %82 = vst [vmem:[#allocation1] ss:$4 sm:$0xff] %v46
    %v83 = vld.sshfl [vmem:[#allocation1] sm:$0xff pattern:$0x73625140]
    %v84 = vld.sshfl [vmem:[#allocation1 + $0x8] sm:$0xff pattern:$0x73625140]
    %v87 = vand.u32 %v62, 4294901760
    %88 = vmatpush.msra.mxu0 %v87
    %v89 = vand.u32 %v61, 4294901760
    %90 = vmatpush.msra.mxu0 %v89
    %v91 = vand.u32 %v60, 4294901760
    %92 = vmatpush.msra.mxu0 %v91
    %v93 = vand.u32 %v59, 4294901760
    %94 = vmatpush.msra.mxu0 %v93
    %v95 = vand.u32 %v58, 4294901760
    %96 = vmatpush.msra.mxu0 %v95
    %v97 = vand.u32 %v57, 4294901760
    %98 = vmatpush.msra.mxu0 %v97
    %v99 = vand.u32 %v56, 4294901760
    %100 = vmatpush.msra.mxu0 %v99
    %v101 = vand.u32 %v55, 4294901760
    %102 = vmatpush.msra.mxu0 %v101
    %v103 = vand.u32 %v54, 4294901760
    %104 = vmatpush.msra.mxu0 %v103
    %v105 = vand.u32 %v53, 4294901760
    %106 = vmatpush.msra.mxu0 %v105
    %v107 = vand.u32 %v52, 4294901760
    %108 = vmatpush.msra.mxu0 %v107
    %v109 = vand.u32 %v51, 4294901760
    %110 = vmatpush.msra.mxu0 %v109
    %v111 = vand.u32 %v50, 4294901760
    %112 = vmatpush.msra.mxu0 %v111
    %v113 = vand.u32 %v49, 4294901760
    %114 = vmatpush.msra.mxu0 %v113
    %v115 = vand.u32 %v48, 4294901760
    %116 = vmatpush.msra.mxu0 %v115
    %v117 = vand.u32 %v47, 4294901760
    %118 = vmatpush.msra.mxu0 %v117
    %v119 = vand.u32 %v83, 4294901760
    %v120 = vsub.f32 %v83, %v119
    %v121 = vand.u32 %v120, 4294901760
    %v122 = vsub.f32 %v120, %v121
    %v123 = vand.u32 %v122, 4294901760
    %124 = vmatmul.f32.gmra.mxu0 %v123
    %v125 = vpop.f32.mrf.mxu0
    %v126 = vadd.f32 %v80, %v125
    %127 = vdwg.mxu0
    %v128 = vand.u32 %v62, 4294901760
    %v129 = vsub.f32 %v62, %v128
    %v130 = vand.u32 %v129, 4294901760
    %v131 = vsub.f32 %v129, %v130
    %v132 = vand.u32 %v131, 4294901760
    %133 = vmatpush.msra.mxu0 %v132
    %v134 = vand.u32 %v61, 4294901760
    %v135 = vsub.f32 %v61, %v134
    %v136 = vand.u32 %v135, 4294901760
    %v137 = vsub.f32 %v135, %v136
    %v138 = vand.u32 %v137, 4294901760
    %139 = vmatpush.msra.mxu0 %v138
    %v140 = vand.u32 %v60, 4294901760
    %v141 = vsub.f32 %v60, %v140
    %v142 = vand.u32 %v141, 4294901760
    %v143 = vsub.f32 %v141, %v142
    %v144 = vand.u32 %v143, 4294901760
    %145 = vmatpush.msra.mxu0 %v144
    %v146 = vand.u32 %v59, 4294901760
    %v147 = vsub.f32 %v59, %v146
    %v148 = vand.u32 %v147, 4294901760
    %v149 = vsub.f32 %v147, %v148
    %v150 = vand.u32 %v149, 4294901760
    %151 = vmatpush.msra.mxu0 %v150
    %v152 = vand.u32 %v58, 4294901760
    %v153 = vsub.f32 %v58, %v152
    %v154 = vand.u32 %v153, 4294901760
    %v155 = vsub.f32 %v153, %v154
    %v156 = vand.u32 %v155, 4294901760
    %157 = vmatpush.msra.mxu0 %v156
    %v158 = vand.u32 %v57, 4294901760
    %v159 = vsub.f32 %v57, %v158
    %v160 = vand.u32 %v159, 4294901760
    %v161 = vsub.f32 %v159, %v160
    %v162 = vand.u32 %v161, 4294901760
    %163 = vmatpush.msra.mxu0 %v162
    %v164 = vand.u32 %v56, 4294901760
    %v165 = vsub.f32 %v56, %v164
    %v166 = vand.u32 %v165, 4294901760
    %v167 = vsub.f32 %v165, %v166
    %v168 = vand.u32 %v167, 4294901760
    %169 = vmatpush.msra.mxu0 %v168
    %v170 = vand.u32 %v55, 4294901760
    %v171 = vsub.f32 %v55, %v170
    %v172 = vand.u32 %v171, 4294901760
    %v173 = vsub.f32 %v171, %v172
    %v174 = vand.u32 %v173, 4294901760
    %175 = vmatpush.msra.mxu0 %v174
    %v176 = vand.u32 %v54, 4294901760
    %v177 = vsub.f32 %v54, %v176
    %v178 = vand.u32 %v177, 4294901760
    %v179 = vsub.f32 %v177, %v178
    %v180 = vand.u32 %v179, 4294901760
    %181 = vmatpush.msra.mxu0 %v180
    %v182 = vand.u32 %v53, 4294901760
    %v183 = vsub.f32 %v53, %v182
    %v184 = vand.u32 %v183, 4294901760
    %v185 = vsub.f32 %v183, %v184
    %v186 = vand.u32 %v185, 4294901760
    %187 = vmatpush.msra.mxu0 %v186
    %v188 = vand.u32 %v52, 4294901760
    %v189 = vsub.f32 %v52, %v188
    %v190 = vand.u32 %v189, 4294901760
    %v191 = vsub.f32 %v189, %v190
    %v192 = vand.u32 %v191, 4294901760
    %193 = vmatpush.msra.mxu0 %v192
    %v194 = vand.u32 %v51, 4294901760
    %v195 = vsub.f32 %v51, %v194
    %v196 = vand.u32 %v195, 4294901760
    %v197 = vsub.f32 %v195, %v196
    %v198 = vand.u32 %v197, 4294901760
    %199 = vmatpush.msra.mxu0 %v198
    %v200 = vand.u32 %v50, 4294901760
    %v201 = vsub.f32 %v50, %v200
    %v202 = vand.u32 %v201, 4294901760
    %v203 = vsub.f32 %v201, %v202
    %v204 = vand.u32 %v203, 4294901760
    %205 = vmatpush.msra.mxu0 %v204
    %v206 = vand.u32 %v49, 4294901760
    %v207 = vsub.f32 %v49, %v206
    %v208 = vand.u32 %v207, 4294901760
    %v209 = vsub.f32 %v207, %v208
    %v210 = vand.u32 %v209, 4294901760
    %211 = vmatpush.msra.mxu0 %v210
    %v212 = vand.u32 %v48, 4294901760
    %v213 = vsub.f32 %v48, %v212
    %v214 = vand.u32 %v213, 4294901760
    %v215 = vsub.f32 %v213, %v214
    %v216 = vand.u32 %v215, 4294901760
    %217 = vmatpush.msra.mxu0 %v216
    %v218 = vand.u32 %v47, 4294901760
    %v219 = vsub.f32 %v47, %v218
    %v220 = vand.u32 %v219, 4294901760
    %v221 = vsub.f32 %v219, %v220
    %v222 = vand.u32 %v221, 4294901760
    %223 = vmatpush.msra.mxu0 %v222
    %v224 = vand.u32 %v83, 4294901760
    %225 = vmatmul.f32.gmra.mxu0 %v224
    %v226 = vpop.f32.mrf.mxu0
    %v227 = vadd.f32 %v126, %v226
    %228 = vdwg.mxu0
    %v229 = vand.u32 %v62, 4294901760
    %v230 = vsub.f32 %v62, %v229
    %231 = vmatpush.msra.mxu0 %v230
    %v232 = vand.u32 %v61, 4294901760
    %v233 = vsub.f32 %v61, %v232
    %234 = vmatpush.msra.mxu0 %v233
    %v235 = vand.u32 %v60, 4294901760
    %v236 = vsub.f32 %v60, %v235
    %237 = vmatpush.msra.mxu0 %v236
    %v238 = vand.u32 %v59, 4294901760
    %v239 = vsub.f32 %v59, %v238
    %240 = vmatpush.msra.mxu0 %v239
    %v241 = vand.u32 %v58, 4294901760
    %v242 = vsub.f32 %v58, %v241
    %243 = vmatpush.msra.mxu0 %v242
    %v244 = vand.u32 %v57, 4294901760
    %v245 = vsub.f32 %v57, %v244
    %246 = vmatpush.msra.mxu0 %v245
    %v247 = vand.u32 %v56, 4294901760
    %v248 = vsub.f32 %v56, %v247
    %249 = vmatpush.msra.mxu0 %v248
    %v250 = vand.u32 %v55, 4294901760
    %v251 = vsub.f32 %v55, %v250
    %252 = vmatpush.msra.mxu0 %v251
    %v253 = vand.u32 %v54, 4294901760
    %v254 = vsub.f32 %v54, %v253
    %255 = vmatpush.msra.mxu0 %v254
    %v256 = vand.u32 %v53, 4294901760
    %v257 = vsub.f32 %v53, %v256
    %258 = vmatpush.msra.mxu0 %v257
    %v259 = vand.u32 %v52, 4294901760
    %v260 = vsub.f32 %v52, %v259
    %261 = vmatpush.msra.mxu0 %v260
    %v262 = vand.u32 %v51, 4294901760
    %v263 = vsub.f32 %v51, %v262
    %264 = vmatpush.msra.mxu0 %v263
    %v265 = vand.u32 %v50, 4294901760
    %v266 = vsub.f32 %v50, %v265
    %267 = vmatpush.msra.mxu0 %v266
    %v268 = vand.u32 %v49, 4294901760
    %v269 = vsub.f32 %v49, %v268
    %270 = vmatpush.msra.mxu0 %v269
    %v271 = vand.u32 %v48, 4294901760
    %v272 = vsub.f32 %v48, %v271
    %273 = vmatpush.msra.mxu0 %v272
    %v274 = vand.u32 %v47, 4294901760
    %v275 = vsub.f32 %v47, %v274
    %276 = vmatpush.msra.mxu0 %v275
    %v277 = vand.u32 %v83, 4294901760
    %v278 = vsub.f32 %v83, %v277
    %279 = vmatmul.f32.gmra.mxu0 %v278
    %v280 = vpop.f32.mrf.mxu0
    %v281 = vadd.f32 %v227, %v280
    %282 = vdwg.mxu0
    %v283 = vand.u32 %v62, 4294901760
    %284 = vmatpush.msra.mxu0 %v283
    %v285 = vand.u32 %v61, 4294901760
    %286 = vmatpush.msra.mxu0 %v285
    %v287 = vand.u32 %v60, 4294901760
    %288 = vmatpush.msra.mxu0 %v287
    %v289 = vand.u32 %v59, 4294901760
    %290 = vmatpush.msra.mxu0 %v289
    %v291 = vand.u32 %v58, 4294901760
    %292 = vmatpush.msra.mxu0 %v291
    %v293 = vand.u32 %v57, 4294901760
    %294 = vmatpush.msra.mxu0 %v293
    %v295 = vand.u32 %v56, 4294901760
    %296 = vmatpush.msra.mxu0 %v295
    %v297 = vand.u32 %v55, 4294901760
    %298 = vmatpush.msra.mxu0 %v297
    %v299 = vand.u32 %v54, 4294901760
    %300 = vmatpush.msra.mxu0 %v299
    %v301 = vand.u32 %v53, 4294901760
    %302 = vmatpush.msra.mxu0 %v301
    %v303 = vand.u32 %v52, 4294901760
    %304 = vmatpush.msra.mxu0 %v303
    %v305 = vand.u32 %v51, 4294901760
    %306 = vmatpush.msra.mxu0 %v305
    %v307 = vand.u32 %v50, 4294901760
    %308 = vmatpush.msra.mxu0 %v307
    %v309 = vand.u32 %v49, 4294901760
    %310 = vmatpush.msra.mxu0 %v309
    %v311 = vand.u32 %v48, 4294901760
    %312 = vmatpush.msra.mxu0 %v311
    %v313 = vand.u32 %v47, 4294901760
    %314 = vmatpush.msra.mxu0 %v313
    %v315 = vand.u32 %v83, 4294901760
    %v316 = vsub.f32 %v83, %v315
    %v317 = vand.u32 %v316, 4294901760
    %318 = vmatmul.f32.gmra.mxu0 %v317
    %v319 = vpop.f32.mrf.mxu0
    %v320 = vadd.f32 %v281, %v319
    %321 = vdwg.mxu0
    %v322 = vand.u32 %v62, 4294901760
    %v323 = vsub.f32 %v62, %v322
    %v324 = vand.u32 %v323, 4294901760
    %325 = vmatpush.msra.mxu0 %v324
    %v326 = vand.u32 %v61, 4294901760
    %v327 = vsub.f32 %v61, %v326
    %v328 = vand.u32 %v327, 4294901760
    %329 = vmatpush.msra.mxu0 %v328
    %v330 = vand.u32 %v60, 4294901760
    %v331 = vsub.f32 %v60, %v330
    %v332 = vand.u32 %v331, 4294901760
    %333 = vmatpush.msra.mxu0 %v332
    %v334 = vand.u32 %v59, 4294901760
    %v335 = vsub.f32 %v59, %v334
    %v336 = vand.u32 %v335, 4294901760
    %337 = vmatpush.msra.mxu0 %v336
    %v338 = vand.u32 %v58, 4294901760
    %v339 = vsub.f32 %v58, %v338
    %v340 = vand.u32 %v339, 4294901760
    %341 = vmatpush.msra.mxu0 %v340
    %v342 = vand.u32 %v57, 4294901760
    %v343 = vsub.f32 %v57, %v342
    %v344 = vand.u32 %v343, 4294901760
    %345 = vmatpush.msra.mxu0 %v344
    %v346 = vand.u32 %v56, 4294901760
    %v347 = vsub.f32 %v56, %v346
    %v348 = vand.u32 %v347, 4294901760
    %349 = vmatpush.msra.mxu0 %v348
    %v350 = vand.u32 %v55, 4294901760
    %v351 = vsub.f32 %v55, %v350
    %v352 = vand.u32 %v351, 4294901760
    %353 = vmatpush.msra.mxu0 %v352
    %v354 = vand.u32 %v54, 4294901760
    %v355 = vsub.f32 %v54, %v354
    %v356 = vand.u32 %v355, 4294901760
    %357 = vmatpush.msra.mxu0 %v356
    %v358 = vand.u32 %v53, 4294901760
    %v359 = vsub.f32 %v53, %v358
    %v360 = vand.u32 %v359, 4294901760
    %361 = vmatpush.msra.mxu0 %v360
    %v362 = vand.u32 %v52, 4294901760
    %v363 = vsub.f32 %v52, %v362
    %v364 = vand.u32 %v363, 4294901760
    %365 = vmatpush.msra.mxu0 %v364
    %v366 = vand.u32 %v51, 4294901760
    %v367 = vsub.f32 %v51, %v366
    %v368 = vand.u32 %v367, 4294901760
    %369 = vmatpush.msra.mxu0 %v368
    %v370 = vand.u32 %v50, 4294901760
    %v371 = vsub.f32 %v50, %v370
    %v372 = vand.u32 %v371, 4294901760
    %373 = vmatpush.msra.mxu0 %v372
    %v374 = vand.u32 %v49, 4294901760
    %v375 = vsub.f32 %v49, %v374
    %v376 = vand.u32 %v375, 4294901760
    %377 = vmatpush.msra.mxu0 %v376
    %v378 = vand.u32 %v48, 4294901760
    %v379 = vsub.f32 %v48, %v378
    %v380 = vand.u32 %v379, 4294901760
    %381 = vmatpush.msra.mxu0 %v380
    %v382 = vand.u32 %v47, 4294901760
    %v383 = vsub.f32 %v47, %v382
    %v384 = vand.u32 %v383, 4294901760
    %385 = vmatpush.msra.mxu0 %v384
    %v386 = vand.u32 %v83, 4294901760
    %387 = vmatmul.f32.gmra.mxu0 %v386
    %v388 = vpop.f32.mrf.mxu0
    %v389 = vadd.f32 %v320, %v388
    %390 = vdwg.mxu0
    %v391 = vand.u32 %v62, 4294901760
    %392 = vmatpush.msra.mxu0 %v391
    %v393 = vand.u32 %v61, 4294901760
    %394 = vmatpush.msra.mxu0 %v393
    %v395 = vand.u32 %v60, 4294901760
    %396 = vmatpush.msra.mxu0 %v395
    %v397 = vand.u32 %v59, 4294901760
    %398 = vmatpush.msra.mxu0 %v397
    %v399 = vand.u32 %v58, 4294901760
    %400 = vmatpush.msra.mxu0 %v399
    %v401 = vand.u32 %v57, 4294901760
    %402 = vmatpush.msra.mxu0 %v401
    %v403 = vand.u32 %v56, 4294901760
    %404 = vmatpush.msra.mxu0 %v403
    %v405 = vand.u32 %v55, 4294901760
    %406 = vmatpush.msra.mxu0 %v405
    %v407 = vand.u32 %v54, 4294901760
    %408 = vmatpush.msra.mxu0 %v407
    %v409 = vand.u32 %v53, 4294901760
    %410 = vmatpush.msra.mxu0 %v409
    %v411 = vand.u32 %v52, 4294901760
    %412 = vmatpush.msra.mxu0 %v411
    %v413 = vand.u32 %v51, 4294901760
    %414 = vmatpush.msra.mxu0 %v413
    %v415 = vand.u32 %v50, 4294901760
    %416 = vmatpush.msra.mxu0 %v415
    %v417 = vand.u32 %v49, 4294901760
    %418 = vmatpush.msra.mxu0 %v417
    %v419 = vand.u32 %v48, 4294901760
    %420 = vmatpush.msra.mxu0 %v419
    %v421 = vand.u32 %v47, 4294901760
    %422 = vmatpush.msra.mxu0 %v421
    %v423 = vand.u32 %v83, 4294901760
    %424 = vmatmul.f32.gmra.mxu0 %v423
    %v425 = vpop.f32.mrf.mxu0
    %v426 = vadd.f32 %v389, %v425
    %427 = vdwg.mxu0
    %v428 = vand.u32 %v78, 4294901760
    %429 = vmatpush.msra.mxu0 %v428
    %v430 = vand.u32 %v77, 4294901760
    %431 = vmatpush.msra.mxu0 %v430
    %v432 = vand.u32 %v76, 4294901760
    %433 = vmatpush.msra.mxu0 %v432
    %v434 = vand.u32 %v75, 4294901760
    %435 = vmatpush.msra.mxu0 %v434
    %v436 = vand.u32 %v74, 4294901760
    %437 = vmatpush.msra.mxu0 %v436
    %v438 = vand.u32 %v73, 4294901760
    %439 = vmatpush.msra.mxu0 %v438
    %v440 = vand.u32 %v72, 4294901760
    %441 = vmatpush.msra.mxu0 %v440
    %v442 = vand.u32 %v71, 4294901760
    %443 = vmatpush.msra.mxu0 %v442
    %v444 = vand.u32 %v70, 4294901760
    %445 = vmatpush.msra.mxu0 %v444
    %v446 = vand.u32 %v69, 4294901760
    %447 = vmatpush.msra.mxu0 %v446
    %v448 = vand.u32 %v68, 4294901760
    %449 = vmatpush.msra.mxu0 %v448
    %v450 = vand.u32 %v67, 4294901760
    %451 = vmatpush.msra.mxu0 %v450
    %v452 = vand.u32 %v66, 4294901760
    %453 = vmatpush.msra.mxu0 %v452
    %v454 = vand.u32 %v65, 4294901760
    %455 = vmatpush.msra.mxu0 %v454
    %v456 = vand.u32 %v64, 4294901760
    %457 = vmatpush.msra.mxu0 %v456
    %v458 = vand.u32 %v63, 4294901760
    %459 = vmatpush.msra.mxu0 %v458
    %v460 = vand.u32 %v84, 4294901760
    %v461 = vsub.f32 %v84, %v460
    %v462 = vand.u32 %v461, 4294901760
    %v463 = vsub.f32 %v461, %v462
    %v464 = vand.u32 %v463, 4294901760
    %465 = vmatmul.f32.gmra.mxu0 %v464
    %v466 = vpop.f32.mrf.mxu0
    %v467 = vadd.f32 %v426, %v466
    %468 = vdwg.mxu0
    %v469 = vand.u32 %v78, 4294901760
    %v470 = vsub.f32 %v78, %v469
    %v471 = vand.u32 %v470, 4294901760
    %v472 = vsub.f32 %v470, %v471
    %v473 = vand.u32 %v472, 4294901760
    %474 = vmatpush.msra.mxu0 %v473
    %v475 = vand.u32 %v77, 4294901760
    %v476 = vsub.f32 %v77, %v475
    %v477 = vand.u32 %v476, 4294901760
    %v478 = vsub.f32 %v476, %v477
    %v479 = vand.u32 %v478, 4294901760
    %480 = vmatpush.msra.mxu0 %v479
    %v481 = vand.u32 %v76, 4294901760
    %v482 = vsub.f32 %v76, %v481
    %v483 = vand.u32 %v482, 4294901760
    %v484 = vsub.f32 %v482, %v483
    %v485 = vand.u32 %v484, 4294901760
    %486 = vmatpush.msra.mxu0 %v485
    %v487 = vand.u32 %v75, 4294901760
    %v488 = vsub.f32 %v75, %v487
    %v489 = vand.u32 %v488, 4294901760
    %v490 = vsub.f32 %v488, %v489
    %v491 = vand.u32 %v490, 4294901760
    %492 = vmatpush.msra.mxu0 %v491
    %v493 = vand.u32 %v74, 4294901760
    %v494 = vsub.f32 %v74, %v493
    %v495 = vand.u32 %v494, 4294901760
    %v496 = vsub.f32 %v494, %v495
    %v497 = vand.u32 %v496, 4294901760
    %498 = vmatpush.msra.mxu0 %v497
    %v499 = vand.u32 %v73, 4294901760
    %v500 = vsub.f32 %v73, %v499
    %v501 = vand.u32 %v500, 4294901760
    %v502 = vsub.f32 %v500, %v501
    %v503 = vand.u32 %v502, 4294901760
    %504 = vmatpush.msra.mxu0 %v503
    %v505 = vand.u32 %v72, 4294901760
    %v506 = vsub.f32 %v72, %v505
    %v507 = vand.u32 %v506, 4294901760
    %v508 = vsub.f32 %v506, %v507
    %v509 = vand.u32 %v508, 4294901760
    %510 = vmatpush.msra.mxu0 %v509
    %v511 = vand.u32 %v71, 4294901760
    %v512 = vsub.f32 %v71, %v511
    %v513 = vand.u32 %v512, 4294901760
    %v514 = vsub.f32 %v512, %v513
    %v515 = vand.u32 %v514, 4294901760
    %516 = vmatpush.msra.mxu0 %v515
    %v517 = vand.u32 %v70, 4294901760
    %v518 = vsub.f32 %v70, %v517
    %v519 = vand.u32 %v518, 4294901760
    %v520 = vsub.f32 %v518, %v519
    %v521 = vand.u32 %v520, 4294901760
    %522 = vmatpush.msra.mxu0 %v521
    %v523 = vand.u32 %v69, 4294901760
    %v524 = vsub.f32 %v69, %v523
    %v525 = vand.u32 %v524, 4294901760
    %v526 = vsub.f32 %v524, %v525
    %v527 = vand.u32 %v526, 4294901760
    %528 = vmatpush.msra.mxu0 %v527
    %v529 = vand.u32 %v68, 4294901760
    %v530 = vsub.f32 %v68, %v529
    %v531 = vand.u32 %v530, 4294901760
    %v532 = vsub.f32 %v530, %v531
    %v533 = vand.u32 %v532, 4294901760
    %534 = vmatpush.msra.mxu0 %v533
    %v535 = vand.u32 %v67, 4294901760
    %v536 = vsub.f32 %v67, %v535
    %v537 = vand.u32 %v536, 4294901760
    %v538 = vsub.f32 %v536, %v537
    %v539 = vand.u32 %v538, 4294901760
    %540 = vmatpush.msra.mxu0 %v539
    %v541 = vand.u32 %v66, 4294901760
    %v542 = vsub.f32 %v66, %v541
    %v543 = vand.u32 %v542, 4294901760
    %v544 = vsub.f32 %v542, %v543
    %v545 = vand.u32 %v544, 4294901760
    %546 = vmatpush.msra.mxu0 %v545
    %v547 = vand.u32 %v65, 4294901760
    %v548 = vsub.f32 %v65, %v547
    %v549 = vand.u32 %v548, 4294901760
    %v550 = vsub.f32 %v548, %v549
    %v551 = vand.u32 %v550, 4294901760
    %552 = vmatpush.msra.mxu0 %v551
    %v553 = vand.u32 %v64, 4294901760
    %v554 = vsub.f32 %v64, %v553
    %v555 = vand.u32 %v554, 4294901760
    %v556 = vsub.f32 %v554, %v555
    %v557 = vand.u32 %v556, 4294901760
    %558 = vmatpush.msra.mxu0 %v557
    %v559 = vand.u32 %v63, 4294901760
    %v560 = vsub.f32 %v63, %v559
    %v561 = vand.u32 %v560, 4294901760
    %v562 = vsub.f32 %v560, %v561
    %v563 = vand.u32 %v562, 4294901760
    %564 = vmatpush.msra.mxu0 %v563
    %v565 = vand.u32 %v84, 4294901760
    %566 = vmatmul.f32.gmra.mxu0 %v565
    %v567 = vpop.f32.mrf.mxu0
    %v568 = vadd.f32 %v467, %v567
    %569 = vdwg.mxu0
    %v570 = vand.u32 %v78, 4294901760
    %v571 = vsub.f32 %v78, %v570
    %572 = vmatpush.msra.mxu0 %v571
    %v573 = vand.u32 %v77, 4294901760
    %v574 = vsub.f32 %v77, %v573
    %575 = vmatpush.msra.mxu0 %v574
    %v576 = vand.u32 %v76, 4294901760
    %v577 = vsub.f32 %v76, %v576
    %578 = vmatpush.msra.mxu0 %v577
    %v579 = vand.u32 %v75, 4294901760
    %v580 = vsub.f32 %v75, %v579
    %581 = vmatpush.msra.mxu0 %v580
    %v582 = vand.u32 %v74, 4294901760
    %v583 = vsub.f32 %v74, %v582
    %584 = vmatpush.msra.mxu0 %v583
    %v585 = vand.u32 %v73, 4294901760
    %v586 = vsub.f32 %v73, %v585
    %587 = vmatpush.msra.mxu0 %v586
    %v588 = vand.u32 %v72, 4294901760
    %v589 = vsub.f32 %v72, %v588
    %590 = vmatpush.msra.mxu0 %v589
    %v591 = vand.u32 %v71, 4294901760
    %v592 = vsub.f32 %v71, %v591
    %593 = vmatpush.msra.mxu0 %v592
    %v594 = vand.u32 %v70, 4294901760
    %v595 = vsub.f32 %v70, %v594
    %596 = vmatpush.msra.mxu0 %v595
    %v597 = vand.u32 %v69, 4294901760
    %v598 = vsub.f32 %v69, %v597
    %599 = vmatpush.msra.mxu0 %v598
    %v600 = vand.u32 %v68, 4294901760
    %v601 = vsub.f32 %v68, %v600
    %602 = vmatpush.msra.mxu0 %v601
    %v603 = vand.u32 %v67, 4294901760
    %v604 = vsub.f32 %v67, %v603
    %605 = vmatpush.msra.mxu0 %v604
    %v606 = vand.u32 %v66, 4294901760
    %v607 = vsub.f32 %v66, %v606
    %608 = vmatpush.msra.mxu0 %v607
    %v609 = vand.u32 %v65, 4294901760
    %v610 = vsub.f32 %v65, %v609
    %611 = vmatpush.msra.mxu0 %v610
    %v612 = vand.u32 %v64, 4294901760
    %v613 = vsub.f32 %v64, %v612
    %614 = vmatpush.msra.mxu0 %v613
    %v615 = vand.u32 %v63, 4294901760
    %v616 = vsub.f32 %v63, %v615
    %617 = vmatpush.msra.mxu0 %v616
    %v618 = vand.u32 %v84, 4294901760
    %v619 = vsub.f32 %v84, %v618
    %620 = vmatmul.f32.gmra.mxu0 %v619
    %v621 = vpop.f32.mrf.mxu0
    %v622 = vadd.f32 %v568, %v621
    %623 = vdwg.mxu0
    %v624 = vand.u32 %v78, 4294901760
    %625 = vmatpush.msra.mxu0 %v624
    %v626 = vand.u32 %v77, 4294901760
    %627 = vmatpush.msra.mxu0 %v626
    %v628 = vand.u32 %v76, 4294901760
    %629 = vmatpush.msra.mxu0 %v628
    %v630 = vand.u32 %v75, 4294901760
    %631 = vmatpush.msra.mxu0 %v630
    %v632 = vand.u32 %v74, 4294901760
    %633 = vmatpush.msra.mxu0 %v632
    %v634 = vand.u32 %v73, 4294901760
    %635 = vmatpush.msra.mxu0 %v634
    %v636 = vand.u32 %v72, 4294901760
    %637 = vmatpush.msra.mxu0 %v636
    %v638 = vand.u32 %v71, 4294901760
    %639 = vmatpush.msra.mxu0 %v638
    %v640 = vand.u32 %v70, 4294901760
    %641 = vmatpush.msra.mxu0 %v640
    %v642 = vand.u32 %v69, 4294901760
    %643 = vmatpush.msra.mxu0 %v642
    %v644 = vand.u32 %v68, 4294901760
    %645 = vmatpush.msra.mxu0 %v644
    %v646 = vand.u32 %v67, 4294901760
    %647 = vmatpush.msra.mxu0 %v646
    %v648 = vand.u32 %v66, 4294901760
    %649 = vmatpush.msra.mxu0 %v648
    %v650 = vand.u32 %v65, 4294901760
    %651 = vmatpush.msra.mxu0 %v650
    %v652 = vand.u32 %v64, 4294901760
    %653 = vmatpush.msra.mxu0 %v652
    %v654 = vand.u32 %v63, 4294901760
    %655 = vmatpush.msra.mxu0 %v654
    %v656 = vand.u32 %v84, 4294901760
    %v657 = vsub.f32 %v84, %v656
    %v658 = vand.u32 %v657, 4294901760
    %659 = vmatmul.f32.gmra.mxu0 %v658
    %v660 = vpop.f32.mrf.mxu0
    %v661 = vadd.f32 %v622, %v660
    %662 = vdwg.mxu0
    %v663 = vand.u32 %v78, 4294901760
    %v664 = vsub.f32 %v78, %v663
    %v665 = vand.u32 %v664, 4294901760
    %666 = vmatpush.msra.mxu0 %v665
    %v667 = vand.u32 %v77, 4294901760
    %v668 = vsub.f32 %v77, %v667
    %v669 = vand.u32 %v668, 4294901760
    %670 = vmatpush.msra.mxu0 %v669
    %v671 = vand.u32 %v76, 4294901760
    %v672 = vsub.f32 %v76, %v671
    %v673 = vand.u32 %v672, 4294901760
    %674 = vmatpush.msra.mxu0 %v673
    %v675 = vand.u32 %v75, 4294901760
    %v676 = vsub.f32 %v75, %v675
    %v677 = vand.u32 %v676, 4294901760
    %678 = vmatpush.msra.mxu0 %v677
    %v679 = vand.u32 %v74, 4294901760
    %v680 = vsub.f32 %v74, %v679
    %v681 = vand.u32 %v680, 4294901760
    %682 = vmatpush.msra.mxu0 %v681
    %v683 = vand.u32 %v73, 4294901760
    %v684 = vsub.f32 %v73, %v683
    %v685 = vand.u32 %v684, 4294901760
    %686 = vmatpush.msra.mxu0 %v685
    %v687 = vand.u32 %v72, 4294901760
    %v688 = vsub.f32 %v72, %v687
    %v689 = vand.u32 %v688, 4294901760
    %690 = vmatpush.msra.mxu0 %v689
    %v691 = vand.u32 %v71, 4294901760
    %v692 = vsub.f32 %v71, %v691
    %v693 = vand.u32 %v692, 4294901760
    %694 = vmatpush.msra.mxu0 %v693
    %v695 = vand.u32 %v70, 4294901760
    %v696 = vsub.f32 %v70, %v695
    %v697 = vand.u32 %v696, 4294901760
    %698 = vmatpush.msra.mxu0 %v697
    %v699 = vand.u32 %v69, 4294901760
    %v700 = vsub.f32 %v69, %v699
    %v701 = vand.u32 %v700, 4294901760
    %702 = vmatpush.msra.mxu0 %v701
    %v703 = vand.u32 %v68, 4294901760
    %v704 = vsub.f32 %v68, %v703
    %v705 = vand.u32 %v704, 4294901760
    %706 = vmatpush.msra.mxu0 %v705
    %v707 = vand.u32 %v67, 4294901760
    %v708 = vsub.f32 %v67, %v707
    %v709 = vand.u32 %v708, 4294901760
    %710 = vmatpush.msra.mxu0 %v709
    %v711 = vand.u32 %v66, 4294901760
    %v712 = vsub.f32 %v66, %v711
    %v713 = vand.u32 %v712, 4294901760
    %714 = vmatpush.msra.mxu0 %v713
    %v715 = vand.u32 %v65, 4294901760
    %v716 = vsub.f32 %v65, %v715
    %v717 = vand.u32 %v716, 4294901760
    %718 = vmatpush.msra.mxu0 %v717
    %v719 = vand.u32 %v64, 4294901760
    %v720 = vsub.f32 %v64, %v719
    %v721 = vand.u32 %v720, 4294901760
    %722 = vmatpush.msra.mxu0 %v721
    %v723 = vand.u32 %v63, 4294901760
    %v724 = vsub.f32 %v63, %v723
    %v725 = vand.u32 %v724, 4294901760
    %726 = vmatpush.msra.mxu0 %v725
    %v727 = vand.u32 %v84, 4294901760
    %728 = vmatmul.f32.gmra.mxu0 %v727
    %v729 = vpop.f32.mrf.mxu0
    %v730 = vadd.f32 %v661, %v729
    %731 = vdwg.mxu0
    %v732 = vand.u32 %v78, 4294901760
    %733 = vmatpush.msra.mxu0 %v732
    %v734 = vand.u32 %v77, 4294901760
    %735 = vmatpush.msra.mxu0 %v734
    %v736 = vand.u32 %v76, 4294901760
    %737 = vmatpush.msra.mxu0 %v736
    %v738 = vand.u32 %v75, 4294901760
    %739 = vmatpush.msra.mxu0 %v738
    %v740 = vand.u32 %v74, 4294901760
    %741 = vmatpush.msra.mxu0 %v740
    %v742 = vand.u32 %v73, 4294901760
    %743 = vmatpush.msra.mxu0 %v742
    %v744 = vand.u32 %v72, 4294901760
    %745 = vmatpush.msra.mxu0 %v744
    %v746 = vand.u32 %v71, 4294901760
    %747 = vmatpush.msra.mxu0 %v746
    %v748 = vand.u32 %v70, 4294901760
    %749 = vmatpush.msra.mxu0 %v748
    %v750 = vand.u32 %v69, 4294901760
    %751 = vmatpush.msra.mxu0 %v750
    %v752 = vand.u32 %v68, 4294901760
    %753 = vmatpush.msra.mxu0 %v752
    %v754 = vand.u32 %v67, 4294901760
    %755 = vmatpush.msra.mxu0 %v754
    %v756 = vand.u32 %v66, 4294901760
    %757 = vmatpush.msra.mxu0 %v756
    %v758 = vand.u32 %v65, 4294901760
    %759 = vmatpush.msra.mxu0 %v758
    %v760 = vand.u32 %v64, 4294901760
    %761 = vmatpush.msra.mxu0 %v760
    %v762 = vand.u32 %v63, 4294901760
    %763 = vmatpush.msra.mxu0 %v762
    %v764 = vand.u32 %v84, 4294901760
    %765 = vmatmul.f32.gmra.mxu0 %v764
    %v766 = vpop.f32.mrf.mxu0
    %v767 = vadd.f32 %v730, %v766
    %768 = vdwg.mxu0
    %v769 = vxor.u32 %v767, 2147483648
    %v770 = vmul.f32 %v769, 1.442695
    %v771 = vpow.pop %v770
    %v772 = vadd.f32 %v771, 1.0
    %v773 = vrcp.pop %v772
    %v774 = vmul.f32 %v772, %v773
    %v775 = vsub.f32 1.0, %v774
    %v776 = vmul.f32 %v773, %v775
    %v777 = vadd.f32 %v773, %v776
    %vm778 = vweird.f32 %v772
    %vm779 = vweird.f32 %v773
    %vm780 = vmor %vm778, %vm779
    %v781 = vsel %vm780, %v773, %v777
    %v782 = vand.u32 2147483647, %v772
    %vm783 = vcmp.eq.f32.partialorder %v782, 8.507059e+37
    %v784 = vand.u32 %v772, 2147483648
    %v785 = vor.u32 1.1754944e-38, %v784
    %v786 = vsel %vm783, %v785, %v781
    %v787 = vmul.f32 1.0, %v786
    %788 = vst [vmem:[#allocation8] sm:$0x3] %v787
    // Predicated region
    $region22: #{tpu_custom_call.1} parent=1 // pred_check
      _
    $region23: #{tpu_custom_call.1} parent=1 // pred_check_branch
      %790 = sbr.rel (0) target = $region25
    $region24: #{tpu_custom_call.1} parent=1 // pred_region
      %792 = vsyncadd [#allocation5], 0
      %s794 = sshll.u32 [#allocation8], 4
      %s795 = int_to_ptr.vmem [resolvable:$true] %s794
      %s796 = sshll.u32 %s3, 4
      %s797 = int_to_ptr.hbm [resolvable:$true] %s796
      %799 = dma.vmem_to_hbm [thread:$0]  %s795, 32, %s797, [#allocation5]
    $region25: #{tpu_custom_call.1} parent=1 // pred_fallthru
      _
    // Predicated region
    $region26: #{tpu_custom_call.1} parent=1 // pred_check
      _
    $region27: #{tpu_custom_call.1} parent=1 // pred_check_branch
      %801 = sbr.rel (0) target = $region29
    $region28: #{tpu_custom_call.1} parent=1 // pred_region
      %803 = dma.done [#allocation5], 32
    $region29: #{tpu_custom_call.1} parent=1 // pred_fallthru
      _
    %804 = vsyncpa [#allocation4], 1
    %805 = vsyncpa [#allocation7], 1
    %806 = vsyncpa [#allocation5], 1

</llo_original>
